<compile_context>
chip_gen: v7x
topology: tpu7x:2x2x1
jax: 0.10.0
libtpu: 0.0.40
codegen_flags: <defaults>
</compile_context>

<pallas_src>
import functools

import jax
import jax.numpy as jnp
from jax.experimental import pallas as pl
from jax.experimental.pallas import tpu as pltpu


def _biasnorm_kernel(x_ref, bias_ref, scale_ref, o_ref, *, eps):
    # x_ref: (TILE_ROWS, DIM); bias_ref / scale_ref: (1, DIM), already f32.
    x = x_ref[...].astype(jnp.float32)
    diff = x - bias_ref[...]
    mean_sq = jnp.mean(diff * diff, axis=-1, keepdims=True)   # (TILE_ROWS, 1), XLU
    inv_rms = jax.lax.rsqrt(mean_sq + eps)                    # EUP rsqrt, no divide
    # Padded rows of a partial edge block produce garbage per-row values here,
    # but the reduction is per-row and padded rows are never stored.
    o_ref[...] = (x * inv_rms * scale_ref[...]).astype(o_ref.dtype)


def _round_up(x, m):
    return ((x + m - 1) // m) * m


def _round_down(x, m):
    return (x // m) * m


def _tpu_vmem_capacity_bytes():
    """Physical VMEM per TensorCore; conservative (v7x-sized) fallback."""
    try:
        cap = getattr(pltpu.get_tpu_info(), "vmem_capacity_bytes", None)
        if cap:
            return int(cap)
    except Exception:
        pass
    return 64 << 20   # safe on every generation


def _select_tiling(rows, dim, itemsize):
    """Pick (tile_rows, vmem_limit_bytes) for a (rows, dim) problem."""
    vmem_cap = _tpu_vmem_capacity_bytes()
    small_vmem = vmem_cap <= (64 << 20)               # v7x: 64 MiB per TC
    vmem_budget = (48 << 20) if small_vmem else (96 << 20)

    # ~6 MiB blocks (in input dtype) keep the kernel near the HBM roofline on
    # all generations; v5e already saturates at 2-4 MiB, bigger doesn't hurt.
    target_block_bytes = 6 << 20

    # Per-row live footprint: double-buffered in + out blocks (input dtype)
    # plus ~3 f32 temps per element (x upcast, diff^2, result).
    bytes_per_row = dim * (4 * itemsize + 3 * 4)

    tr = target_block_bytes // max(1, dim * itemsize)
    tr = min(tr, 4096)                                # cap lifted from 1024
    # Keep the full per-step f32-aware footprint within ~70% of the budget.
    tr = min(tr, int(0.7 * vmem_budget) // max(1, bytes_per_row))
    tr = max(8, _round_down(tr, 8))

    if rows < 8:
        return int(rows), 16 << 20                    # single full-array block

    tr = min(tr, max(8, _round_down(rows, 8)))

    # >= 4 grid steps when big enough: >= 2 pipelined steps per TensorCore on
    # v7x's 2 cores; harmless elsewhere.
    if rows >= 32:
        tr = min(tr, max(8, _round_down(pl.cdiv(rows, 4), 8)))

    # Small odd grids leave one v7x core ~50% more work: nudge to even steps.
    n_steps = pl.cdiv(rows, tr)
    if 1 < n_steps <= 16 and n_steps % 2 == 1:
        for cand in (_round_up(pl.cdiv(rows, n_steps + 1), 8),
                     _round_down(pl.cdiv(rows, n_steps + 1), 8)):
            if cand >= 8 and pl.cdiv(rows, cand) % 2 == 0:
                tr = cand
                break

    tr = int(tr)
    footprint = tr * bytes_per_row + (4 << 20)        # params + headroom
    vmem_limit = int(min(max(footprint, 16 << 20), vmem_budget))
    return tr, vmem_limit


def bias_norm(x, bias, log_scale, *, eps=1e-5, tile_rows=None):
    """BiasNorm forward. x: (..., dim); bias, log_scale: (dim,)."""
    orig_shape = x.shape
    dim = orig_shape[-1]
    x2 = x.reshape(-1, dim)
    rows = x2.shape[0]

    itemsize = jnp.dtype(x.dtype).itemsize
    if tile_rows is None:
        tile_rows, vmem_limit = _select_tiling(rows, dim, itemsize)
    else:
        bytes_per_row = dim * (4 * itemsize + 3 * 4)
        vmem_limit = int(min(max(tile_rows * bytes_per_row + (4 << 20), 16 << 20),
                             48 << 20))

    # Per-call f32 constants: exp() and the param upcasts are hoisted off the
    # per-grid-step path entirely.
    bias2 = bias.astype(jnp.float32).reshape(1, dim)
    scale2 = jnp.exp(log_scale.astype(jnp.float32)).reshape(1, dim)

    grid = (pl.cdiv(rows, tile_rows),)   # partial edge block handled by Pallas

    kernel = functools.partial(_biasnorm_kernel, eps=eps)

    # TODO(synk): for dim < 128 (or non-multiples of 128) the output stores are
    # lane-masked (partial vst); a lane-dense repack would change the reduction
    # layout so it is left as-is. Zipformer dims (256/384/512) are lane-dense.
    out = pl.pallas_call(
        kernel,
        out_shape=jax.ShapeDtypeStruct((rows, dim), x.dtype),
        grid_spec=pltpu.PrefetchScalarGridSpec(
            num_scalar_prefetch=0,
            grid=grid,
            in_specs=[
                pl.BlockSpec((tile_rows, dim), lambda i: (i, 0)),
                # Constant index_map -> these tiny params are DMA'd only once
                # (block index never changes across the grid).
                pl.BlockSpec((1, dim), lambda i: (0, 0)),
                pl.BlockSpec((1, dim), lambda i: (0, 0)),
            ],
            out_specs=pl.BlockSpec((tile_rows, dim), lambda i: (i, 0)),
        ),
        compiler_params=pltpu.CompilerParams(
            dimension_semantics=("parallel",),
            vmem_limit_bytes=vmem_limit,
        ),
    )(x2, bias2, scale2)

    return out.reshape(orig_shape)


def bias_norm_ref(x, bias, log_scale, eps=1e-5):
    x = x.astype(jnp.float32)
    rms = jnp.sqrt(jnp.mean((x - bias) ** 2, axis=-1, keepdims=True) + eps)
    return (x / rms) * jnp.exp(log_scale)


if __name__ == "__main__":
    key = jax.random.PRNGKey(0)
    kx, kb, ks, kx2 = jax.random.split(key, 4)

    # Small shape consistent with the module's usage: (seq, batch, dim).
    seq, batch, dim = 8, 2, 32
    x = jax.random.normal(kx, (seq, batch, dim), dtype=jnp.float32)
    # Module __init__ zero-inits these; perturb deterministically so the full
    # math path (bias subtract + scale) is exercised.
    bias = 0.1 * jax.random.normal(kb, (dim,), dtype=jnp.float32)
    log_scale = 0.05 * jax.random.normal(ks, (dim,), dtype=jnp.float32)

    out = jax.block_until_ready(bias_norm(x, bias, log_scale))
    ref = bias_norm_ref(x, bias, log_scale)
    assert out.shape == x.shape
    assert jnp.allclose(out, ref, atol=1e-5, rtol=1e-5), "mismatch vs reference"

    # Rows not a multiple of the tile: exercises the cdiv / partial-block path.
    x_odd = jax.random.normal(kx2, (7, 3, dim), dtype=jnp.float32)
    out_odd = jax.block_until_ready(bias_norm(x_odd, bias, log_scale))
    ref_odd = bias_norm_ref(x_odd, bias, log_scale)
    assert out_odd.shape == x_odd.shape
    assert jnp.allclose(out_odd, ref_odd, atol=1e-5, rtol=1e-5), "mismatch (partial block)"

    # bf16 input: exercises the f32-intermediate accounting path.
    x_bf = x.astype(jnp.bfloat16)
    out_bf = jax.block_until_ready(bias_norm(x_bf, bias, log_scale))
    ref_bf = bias_norm_ref(x_bf, bias, log_scale)
    assert out_bf.shape == x_bf.shape
    assert jnp.allclose(out_bf.astype(jnp.float32), ref_bf, atol=2e-2, rtol=2e-2), \
        "mismatch (bf16)"

    print("KERNEL_OK")
</pallas_src>

<mosaic_0001>
module attributes {stable_mosaic.version = 11 : i64} {
  func.func @_biasnorm_kernel(%arg0: i32, %arg1: memref<16x32xf32, #tpu.memory_space<vmem>>, %arg2: memref<1x32xf32, #tpu.memory_space<vmem>>, %arg3: memref<1x32xf32, #tpu.memory_space<vmem>>, %arg4: memref<16x32xf32, #tpu.memory_space<vmem>>) attributes {dimension_semantics = [#tpu.dimension_semantics<parallel>], iteration_bounds = array<i64: 1>, scalar_prefetch = 0 : i64, scratch_operands = 0 : i64, tpu.core_type = #tpu.core_type<tc>, window_params = [{transform_indices = @transform_0, window_bounds = array<i64: 16, 32>}, {pipeline_mode = #tpu.pipeline_mode<synchronous>, transform_indices = @transform_1, window_bounds = array<i64: 1, 32>}, {pipeline_mode = #tpu.pipeline_mode<synchronous>, transform_indices = @transform_2, window_bounds = array<i64: 1, 32>}, {transform_indices = @transform_3, window_bounds = array<i64: 16, 32>}]} {
    %c0 = arith.constant 0 : index
    %c0_0 = arith.constant 0 : index
    %0 = vector.load %arg1[%c0, %c0_0] : memref<16x32xf32, #tpu.memory_space<vmem>>, vector<16x32xf32>
    %c0_1 = arith.constant 0 : index
    %c0_2 = arith.constant 0 : index
    %1 = vector.load %arg2[%c0_1, %c0_2] : memref<1x32xf32, #tpu.memory_space<vmem>>, vector<1x32xf32>
    %2 = vector.broadcast %1 : vector<1x32xf32> to vector<16x32xf32>
    %3 = arith.subf %0, %2 : vector<16x32xf32>
    %4 = arith.mulf %3, %3 : vector<16x32xf32>
    %cst = arith.constant dense<0.000000e+00> : vector<16xf32>
    %5 = vector.multi_reduction <add>, %4, %cst [1] : vector<16x32xf32> to vector<16xf32>
    %6 = vector.shape_cast %5 : vector<16xf32> to vector<16x1xf32>
    %cst_3 = arith.constant 3.200000e+01 : f32
    %7 = vector.broadcast %cst_3 : f32 to vector<16x1xf32>
    %8 = arith.divf %6, %7 : vector<16x1xf32>
    %cst_4 = arith.constant 9.99999974E-6 : f32
    %9 = vector.broadcast %cst_4 : f32 to vector<16x1xf32>
    %10 = arith.addf %8, %9 : vector<16x1xf32>
    %11 = math.rsqrt %10 : vector<16x1xf32>
    %12 = vector.broadcast %11 : vector<16x1xf32> to vector<16x32xf32>
    %13 = arith.mulf %0, %12 : vector<16x32xf32>
    %c0_5 = arith.constant 0 : index
    %c0_6 = arith.constant 0 : index
    %14 = vector.load %arg3[%c0_5, %c0_6] : memref<1x32xf32, #tpu.memory_space<vmem>>, vector<1x32xf32>
    %15 = vector.broadcast %14 : vector<1x32xf32> to vector<16x32xf32>
    %16 = arith.mulf %13, %15 : vector<16x32xf32>
    %c0_7 = arith.constant 0 : index
    %c0_8 = arith.constant 0 : index
    %17 = vector.load %arg4[%c0_7, %c0_8] : memref<16x32xf32, #tpu.memory_space<vmem>>, vector<16x32xf32>
    tpu.vector_store %arg4[%c0_7, %c0_8], %16 {strides = array<i32>} : memref<16x32xf32, #tpu.memory_space<vmem>>, vector<16x32xf32>,
    return
  }
  func.func @transform_0(%arg0: i32) -> (i32, i32) {
    %c0_i32 = arith.constant 0 : i32
    %c0_i32_0 = arith.constant 0 : i32
    return %arg0, %c0_i32 : i32, i32
  }
  func.func @transform_1(%arg0: i32) -> (i32, i32) {
    %c0_i32 = arith.constant 0 : i32
    %c0_i32_0 = arith.constant 0 : i32
    %c0_i32_1 = arith.constant 0 : i32
    return %c0_i32, %c0_i32_0 : i32, i32
  }
  func.func @transform_2(%arg0: i32) -> (i32, i32) {
    %c0_i32 = arith.constant 0 : i32
    %c0_i32_0 = arith.constant 0 : i32
    %c0_i32_1 = arith.constant 0 : i32
    return %c0_i32, %c0_i32_0 : i32, i32
  }
  func.func @transform_3(%arg0: i32) -> (i32, i32) {
    %c0_i32 = arith.constant 0 : i32
    %c0_i32_0 = arith.constant 0 : i32
    return %arg0, %c0_i32 : i32, i32
  }
}

</mosaic_0001>

<llo_original>
// kernel: tpu_custom_call.1
$region0: #{tpu_custom_call.1}
  #allocation0 [shape = 'u32[]', space=smem, size = 0x4, offset = 0x4, fixed_abs, tag = 'smem constant byte address 0x4 - core index']
  #allocation1 [shape = 'u32[144,128]{1,0:T(1,128)}', space=vmem, size = 0x12000, scoped, tag = 'internal scratch']
  %s0 = inlined_call_operand.hbm [shape: f32[16,32], index: 0, kind: input, shape index: {}]
  %s1 = inlined_call_operand.vmem [shape: f32[1,32], index: 1, kind: input, shape index: {}]
  %s2 = inlined_call_operand.vmem [shape: f32[1,32], index: 2, kind: input, shape index: {}]
  %s3 = inlined_call_operand.hbm [shape: f32[16,32], index: 3, kind: output, shape index: {}]
  %s4 = sld [smem:[#allocation0]]
  $region26: #{tpu_custom_call.1} parent=0
    _
  %s6 = ssub.s32 1, %s4
  %s7 = scalar_select 0, %s6, %s4
  $region1: #{tpu_custom_call.1} parent=0
    #allocation2 [shape = 'u8[8192]{0}', space=vmem, size = 0x2000, scoped, tag = 'input window, operand 0, single buffered']
    #allocation3 [shape = 's32[1]{0}', space=sflag, size = 0x4, scoped, tag = 'scoped memory for tpu_custom_call.1']
    #allocation4 [shape = 's32[1]{0}', space=sflag, size = 0x4, scoped, tag = 'scoped memory for tpu_custom_call.1']
    #allocation5 [shape = 'u8[8192]{0}', space=vmem, size = 0x2000, scoped, tag = 'output window, operand 0, single buffered']
    %8 = vsyncpa [#allocation3], 0
    %9 = vsyncpa [#allocation4], 0
    // Predicated region
    $region2: #{tpu_custom_call.1} parent=1 // pred_check
      _
    $region3: #{tpu_custom_call.1} parent=1 // pred_check_branch
      %11 = sbr.rel (0) target = $region5
    $region4: #{tpu_custom_call.1} parent=1 // pred_region
      %s13 = ssub.s32 256, 256
      %14 = vsyncadd [#allocation3], %s13
      %s15 = sshll.u32 [#allocation2], 4
      %s16 = int_to_ptr.vmem [resolvable:$true] %s15
      %21 = dma.hbm_to_vmem [thread:$0]  %s0, 256, %s16, [#allocation3], 128, 128, 8
    $region5: #{tpu_custom_call.1} parent=1 // pred_fallthru
      _
    // Predicated region
    $region6: #{tpu_custom_call.1} parent=1 // pred_check
      _
    $region7: #{tpu_custom_call.1} parent=1 // pred_check_branch
      %23 = sbr.rel (0) target = $region9
    $region8: #{tpu_custom_call.1} parent=1 // pred_region
      _
    $region9: #{tpu_custom_call.1} parent=1 // pred_fallthru
      _
    // Predicated region
    $region10: #{tpu_custom_call.1} parent=1 // pred_check
      _
    $region11: #{tpu_custom_call.1} parent=1 // pred_check_branch
      %25 = sbr.rel (0) target = $region13
    $region12: #{tpu_custom_call.1} parent=1 // pred_region
      _
    $region13: #{tpu_custom_call.1} parent=1 // pred_fallthru
      _
    // Predicated region
    $region14: #{tpu_custom_call.1} parent=1 // pred_check
      _
    $region15: #{tpu_custom_call.1} parent=1 // pred_check_branch
      %27 = sbr.rel (0) target = $region17
    $region16: #{tpu_custom_call.1} parent=1 // pred_region
      %28 = dma.done [#allocation3], 256
    $region17: #{tpu_custom_call.1} parent=1 // pred_fallthru
      _
    %v29 = vld [vmem:[#allocation2] sm:$0xff]
    %v30 = vld [vmem:[#allocation2 + $0x8] sm:$0xff]
    %v31 = vld [vmem:[%s1] sm:$0x1]
    %v33 = vlaneseq
    %v34 = vshrl.u32 %v33, 7
    %v35 = vsub.s32 0, %v34
    %v36 = vrot.slane %v31, %v35
    %v38 = vsub.f32 %v29, %v36
    %v39 = vsub.f32 %v30, %v36
    %v40 = vmul.f32 %v38, %v38
    %v41 = vmul.f32 %v39, %v39
    %vm42 = vcmask 261120
    %v43 = vsel %vm42, %v40, 0.0
    %44 = vadd.xlane.f32.xlu0 %v43
    %v45 = vpop.xlane.xlu0 %44
    %v46 = vsel %vm42, %v41, 0.0
    %47 = vadd.xlane.f32.xlu0 %v46
    %v48 = vpop.xlane.xlu0 %47
    %v49 = vrcp.pop 32.0
    %v50 = vmul.f32 %v45, %v49
    %v51 = vmul.f32 %v48, %v49
    %v52 = vadd.f32 %v50, 1e-05
    %v53 = vadd.f32 %v51, 1e-05
    %v54 = vrsqrt.pop %v52
    %v55 = vrsqrt.pop %v53
    %v56 = vmul.f32 %v29, %v54
    %v57 = vmul.f32 %v30, %v55
    %v58 = vld [vmem:[%s2] sm:$0x1]
    %v60 = vlaneseq
    %v61 = vshrl.u32 %v60, 7
    %v62 = vsub.s32 0, %v61
    %v63 = vrot.slane %v58, %v62
    %v65 = vmul.f32 %v56, %v63
    %v66 = vmul.f32 %v57, %v63
    %67 = vst.msk [vmem:[#allocation5] sm:$0xff] %vm42, %v65
    %68 = vst.msk [vmem:[#allocation5 + $0x8] sm:$0xff] %vm42, %v66
    // Predicated region
    $region18: #{tpu_custom_call.1} parent=1 // pred_check
      _
    $region19: #{tpu_custom_call.1} parent=1 // pred_check_branch
      %70 = sbr.rel (0) target = $region21
    $region20: #{tpu_custom_call.1} parent=1 // pred_region
      %s72 = ssub.s32 256, 256
      %73 = vsyncadd [#allocation4], %s72
      %s74 = sshll.u32 [#allocation5], 4
      %s75 = int_to_ptr.vmem [resolvable:$true] %s74
      %80 = dma.vmem_to_hbm [thread:$0]  %s75, 256, %s3, [#allocation4], 128, 128, 8
    $region21: #{tpu_custom_call.1} parent=1 // pred_fallthru
      _
    // Predicated region
    $region22: #{tpu_custom_call.1} parent=1 // pred_check
      _
    $region23: #{tpu_custom_call.1} parent=1 // pred_check_branch
      %82 = sbr.rel (0) target = $region25
    $region24: #{tpu_custom_call.1} parent=1 // pred_region
      %83 = dma.done [#allocation4], 256
    $region25: #{tpu_custom_call.1} parent=1 // pred_fallthru
      _
    %84 = vsyncpa [#allocation3], 1
    %85 = vsyncpa [#allocation4], 1

</llo_original>
